<compile_context>
chip_gen: v6e
topology: v6e:2x2x1
jax: 0.10.0
libtpu: 0.0.40
codegen_flags: <defaults>
</compile_context>

<pallas_src>
import functools

import jax
import jax.numpy as jnp
from jax.experimental import pallas as pl
from jax.experimental.pallas import tpu as pltpu

_LANE = 128
_SUBLANE = 8


def _fold_factor(c, f, itemsize):
    """Factor k (dividing f) folding (c, f) -> (c*k, f//k).

    Fills the vreg sublane dim when c < 8 (16 for bf16, 32 for int8) without
    giving up 128-lane alignment of the folded spatial dim.  Returns 1 when no
    such fold exists (layout then falls back to the unfolded path)."""
    if f <= 1:
        return 1
    sub_target = _SUBLANE * max(1, 4 // max(1, itemsize))   # 8 f32/16 bf16/32 i8
    for target in sorted({sub_target, _SUBLANE}, reverse=True):
        if c % target == 0:
            return 1
        for k in range(2, min(f, 8 * target) + 1):
            if f % k == 0 and (c * k) % target == 0 and (f // k) % _LANE == 0:
                return k
    return 1


def _pick_lane_tile(cs, fprime, itemsize, budget_bytes):
    """Lane tile (multiple of 128) for the folded spatial dim plus the padded
    extent it implies.  Padding is with zeros and is loss-neutral."""
    row_bytes = max(1, cs * itemsize)
    max_tf = max(_LANE, (budget_bytes // row_bytes) // _LANE * _LANE)
    f_rounded = pl.cdiv(fprime, _LANE) * _LANE
    tf = min(max_tf, f_rounded)
    if f_rounded % tf:
        # Balance tile sizes so we never degrade to tiny strided-DMA tiles;
        # the remainder becomes zero padding instead.
        n_tiles = pl.cdiv(f_rounded, tf)
        tf = pl.cdiv(pl.cdiv(f_rounded, n_tiles), _LANE) * _LANE
    f_padded = pl.cdiv(fprime, tf) * tf
    return tf, f_padded


def _sq_err_sums(t, p, roll_k):
    """(sum((t - p)^2), sum((t - roll_rows(p))^2)) for a 2-D block, where
    roll_rows(p)[r] = p[(r + roll_k) % n_rows] (the module's dim=1 roll
    expressed on the sublane-folded layout)."""
    d1 = t - p
    s1 = jnp.sum(d1 * d1)
    n = t.shape[0]
    k = roll_k % n
    if k == 0:                       # roll of a length-1 axis is the identity
        return s1, s1
    if n % _SUBLANE == 0 and t.shape[1] % _LANE == 0:
        # Aligned block: single XLU sublane rotate + one sub/square/sum.
        # pltpu.roll follows jnp.roll semantics: roll(x, n-k)[r] = x[(r+k)%n].
        p_r = pltpu.roll(p, shift=n - k, axis=0)
        d2 = t - p_r
        s2 = jnp.sum(d2 * d2)
    else:
        # Small / unaligned row count (e.g. the tiny track tensor): two static
        # sublane slices; no rolled temporary is ever materialized in HBM.
        a = t[: n - k, :] - p[k:, :]
        b = t[n - k:, :] - p[:k, :]
        s2 = jnp.sum(a * a) + jnp.sum(b * b)
    return s1, s2


def _fused_mse_kernel(tvs_t_ref, tvs_p_ref, trk_t_ref, trk_p_ref,
                      o_ref, acc_ref, *, roll_k):
    """Grid step (b, fi): accumulate the four squared-error sums for batch b.

    acc_ref (per-core SMEM, (4,) f32) holds the running sums:
      [0] sum((tvs_t - tvs_p)^2)          [1] sum((tvs_t - roll(tvs_p))^2)
      [2] sum((trk_t - trk_p)^2)          [3] sum((trk_t - roll(trk_p))^2)
    o_ref is the per-batch (1, 8, 128) f32 VMEM block; row i carries acc[i]
    broadcast along lanes (rows 4..7 zero), written once at the last fi."""
    fi = pl.program_id(1)
    n_fi = pl.num_programs(1)

    tt = tvs_t_ref[0].astype(jnp.float32)        # (Cs, tF)
    tp = tvs_p_ref[0].astype(jnp.float32)
    s1, s2 = _sq_err_sums(tt, tp, roll_k)

    @pl.when(fi == 0)
    def _():
        kt = trk_t_ref[0].astype(jnp.float32)    # (T, D) — block is resident,
        kp = trk_p_ref[0].astype(jnp.float32)    # DMA'd once per batch.
        e1, e2 = _sq_err_sums(kt, kp, 1)
        acc_ref[0] = s1
        acc_ref[1] = s2
        acc_ref[2] = e1
        acc_ref[3] = e2

    @pl.when(fi > 0)
    def _():
        acc_ref[0] += s1
        acc_ref[1] += s2

    @pl.when(fi == n_fi - 1)
    def _():
        row = jax.lax.broadcasted_iota(jnp.int32, (_SUBLANE, _LANE), 0)
        o_ref[0] = jnp.where(
            row == 0, acc_ref[0],
            jnp.where(row == 1, acc_ref[1],
                      jnp.where(row == 2, acc_ref[2],
                                jnp.where(row == 3, acc_ref[3], 0.0))))


def mse_loss_forward(tvs_target, tvs_pred, track_target, track_pred):
    """Forward pass of MseLoss. Returns (tvs_loss, track_loss)."""
    assert tvs_target.shape == tvs_pred.shape
    assert track_target.shape == track_pred.shape
    assert tvs_target.shape[0] == track_target.shape[0], "batch must match"

    B, C = tvs_target.shape[0], tvs_target.shape[1]
    F = 1
    for d in tvs_target.shape[2:]:
        F *= d
    T = track_target.shape[1]
    D = 1
    for d in track_target.shape[2:]:
        D *= d

    itemsize = jnp.dtype(tvs_target.dtype).itemsize

    # ---- generation-aware VMEM budget --------------------------------------
    try:
        vmem_cap = int(pltpu.get_tpu_info().vmem_capacity_bytes)
    except Exception:                               # conservative default: v7x
        vmem_cap = 64 * 1024 * 1024
    vmem_limit = 3 * vmem_cap // 4                  # 48 MiB v7x / 96 MiB v5e,v6e
    # Per tvs block: 2 inputs x 2 pipeline buffers (input dtype) plus ~4
    # block-sized f32 temporaries (casts, diffs, rolled pred, squares).
    blk_factor = 4 + 16 // max(1, itemsize)
    blk_budget = max(256 * 1024, (vmem_limit - (4 << 20)) // blk_factor)

    # ---- layout: sublane fold + lane-aligned tiling (free reshapes) --------
    k = _fold_factor(C, F, itemsize)
    Cs, Ff = C * k, F // k
    tF, Fp = _pick_lane_tile(Cs, Ff, itemsize, blk_budget)
    nF = Fp // tF

    tvs_t = tvs_target.reshape(B, Cs, Ff)
    tvs_p = tvs_pred.reshape(B, Cs, Ff)
    if Fp != Ff:                                    # zero pad: loss-neutral
        pad = ((0, 0), (0, 0), (0, Fp - Ff))
        tvs_t = jnp.pad(tvs_t, pad)
        tvs_p = jnp.pad(tvs_p, pad)
    trk_t = track_target.reshape(B, T, D)
    trk_p = track_pred.reshape(B, T, D)

    tvs_spec = pl.BlockSpec((1, Cs, tF), lambda b, fi: (b, 0, fi))
    trk_spec = pl.BlockSpec((1, T, D), lambda b, fi: (b, 0, 0))
    out_spec = pl.BlockSpec((1, _SUBLANE, _LANE), lambda b, fi: (b, 0, 0))

    tvs_n = B * C * F
    trk_n = B * T * D
    trk_item = jnp.dtype(track_target.dtype).itemsize
    cost = pl.CostEstimate(
        flops=2 * 3 * (tvs_n + trk_n),              # sub, mul, add x two losses
        transcendentals=0,
        bytes_accessed=(2 * B * Cs * Fp * itemsize + 2 * trk_n * trk_item
                        + B * _SUBLANE * _LANE * 4),
    )

    partials = pl.pallas_call(
        functools.partial(_fused_mse_kernel, roll_k=k),
        out_shape=jax.ShapeDtypeStruct((B, _SUBLANE, _LANE), jnp.float32),
        grid=(B, nF),
        in_specs=[tvs_spec, tvs_spec, trk_spec, trk_spec],
        out_specs=out_spec,
        scratch_shapes=[pltpu.SMEM((4,), jnp.float32)],
        compiler_params=pltpu.CompilerParams(
            # Batch axis "parallel": per-batch output blocks + per-core SMEM
            # scratch make this safe; v7x shards batches over its 2 TCs.
            # The reduction axis fi must stay "arbitrary" (in-order).
            dimension_semantics=("parallel", "arbitrary"),
            vmem_limit_bytes=vmem_limit,
        ),
        cost_estimate=cost,
    )(tvs_t, tvs_p, trk_t, trk_p)

    # Tiny scalar epilogue: per-batch sums -> means -> pick the smaller pair.
    sums = jnp.sum(partials[:, :4, 0], axis=0)
    tvs_l1 = sums[0] / jnp.float32(tvs_n)
    tvs_l2 = sums[1] / jnp.float32(tvs_n)
    trk_l1 = sums[2] / jnp.float32(trk_n)
    trk_l2 = sums[3] / jnp.float32(trk_n)
    use_first = (tvs_l1 + trk_l1) < (tvs_l2 + trk_l2)
    tvs_loss = jnp.where(use_first, tvs_l1, tvs_l2)
    track_loss = jnp.where(use_first, trk_l1, trk_l2)
    return tvs_loss, track_loss


def _reference(tvs_target, tvs_pred, track_target, track_pred):
    """Pure-JAX reference for validation."""
    mse = lambda a, b: jnp.mean((a.astype(jnp.float32)
                                 - b.astype(jnp.float32)) ** 2)
    l1a = mse(tvs_target, tvs_pred)
    l1b = mse(track_target, track_pred)
    tvs_r = jnp.concatenate([tvs_pred[:, 1:], tvs_pred[:, :1]], axis=1)
    trk_r = jnp.concatenate([track_pred[:, 1:], track_pred[:, :1]], axis=1)
    l2a = mse(tvs_target, tvs_r)
    l2b = mse(track_target, trk_r)
    use1 = (l1a + l1b) < (l2a + l2b)
    return jnp.where(use1, l1a, l2a), jnp.where(use1, l1b, l2b)


if __name__ == "__main__":
    key = jax.random.PRNGKey(0)
    k1, k2, k3, k4 = jax.random.split(key, 4)

    # Small shapes consistent with the module's forward:
    #   tvs_*:   (B, C, H, W) = (2, 4, 16, 16)   (rolled on dim=1)
    #   track_*: (B, T, D)    = (2, 4, 16)       (rolled on dim=1)
    tvs_target = jax.random.normal(k1, (2, 4, 16, 16), dtype=jnp.float32)
    tvs_pred = jax.random.normal(k2, (2, 4, 16, 16), dtype=jnp.float32)
    track_target = jax.random.normal(k3, (2, 4, 16), dtype=jnp.float32)
    track_pred = jax.random.normal(k4, (2, 4, 16), dtype=jnp.float32)

    tvs_loss, track_loss = jax.jit(mse_loss_forward)(
        tvs_target, tvs_pred, track_target, track_pred)
    jax.block_until_ready((tvs_loss, track_loss))

    ref_tvs, ref_track = _reference(
        tvs_target, tvs_pred, track_target, track_pred)
    assert jnp.allclose(tvs_loss, ref_tvs, rtol=1e-5, atol=1e-5)
    assert jnp.allclose(track_loss, ref_track, rtol=1e-5, atol=1e-5)

    print("KERNEL_OK")
</pallas_src>

<mosaic_0001>
module attributes {stable_mosaic.version = 11 : i64} {
  func.func @_fused_mse_kernel(%arg0: i32, %arg1: i32, %arg2: memref<1x8x128xf32, #tpu.memory_space<vmem>>, %arg3: memref<1x8x128xf32, #tpu.memory_space<vmem>>, %arg4: memref<1x4x16xf32, #tpu.memory_space<vmem>>, %arg5: memref<1x4x16xf32, #tpu.memory_space<vmem>>, %arg6: memref<1x8x128xf32, #tpu.memory_space<vmem>>, %arg7: memref<4xf32, #tpu.memory_space<smem>>) attributes {dimension_semantics = [#tpu.dimension_semantics<parallel>, #tpu.dimension_semantics<arbitrary>], iteration_bounds = array<i64: 2, 1>, scalar_prefetch = 0 : i64, scratch_operands = 1 : i64, tpu.core_type = #tpu.core_type<tc>, window_params = [{transform_indices = @transform_0, window_bounds = array<i64: 1, 8, 128>}, {transform_indices = @transform_1, window_bounds = array<i64: 1, 8, 128>}, {transform_indices = @transform_2, window_bounds = array<i64: 1, 4, 16>}, {transform_indices = @transform_3, window_bounds = array<i64: 1, 4, 16>}, {transform_indices = @transform_4, window_bounds = array<i64: 1, 8, 128>}]} {
    %c0 = arith.constant 0 : index
    %c0_0 = arith.constant 0 : index
    %c0_1 = arith.constant 0 : index
    %0 = vector.load %arg2[%c0, %c0_0, %c0_1] : memref<1x8x128xf32, #tpu.memory_space<vmem>>, vector<1x8x128xf32>
    %1 = vector.shape_cast %0 : vector<1x8x128xf32> to vector<8x128xf32>
    %c0_2 = arith.constant 0 : index
    %c0_3 = arith.constant 0 : index
    %c0_4 = arith.constant 0 : index
    %2 = vector.load %arg3[%c0_2, %c0_3, %c0_4] : memref<1x8x128xf32, #tpu.memory_space<vmem>>, vector<1x8x128xf32>
    %3 = vector.shape_cast %2 : vector<1x8x128xf32> to vector<8x128xf32>
    %4 = arith.subf %1, %3 : vector<8x128xf32>
    %5 = arith.mulf %4, %4 : vector<8x128xf32>
    %6 = vector.shape_cast %5 : vector<8x128xf32> to vector<1x8x128xf32>
    %cst = arith.constant dense<0.000000e+00> : vector<1xf32>
    %7 = vector.multi_reduction <add>, %6, %cst [1, 2] : vector<1x8x128xf32> to vector<1xf32>
    %8 = vector.shape_cast %7 : vector<1xf32> to vector<1x1x1xf32>
    %9 = vector.extract %8[0, 0, 0] : f32 from vector<1x1x1xf32>
    %c6_i32 = arith.constant 6 : i32
    %10 = tpu.dynamic_rotate %3 by %c6_i32 dim 0 : vector<8x128xf32>, i32 -> vector<8x128xf32>
    %11 = arith.subf %1, %10 : vector<8x128xf32>
    %12 = arith.mulf %11, %11 : vector<8x128xf32>
    %13 = vector.shape_cast %12 : vector<8x128xf32> to vector<1x8x128xf32>
    %cst_5 = arith.constant dense<0.000000e+00> : vector<1xf32>
    %14 = vector.multi_reduction <add>, %13, %cst_5 [1, 2] : vector<1x8x128xf32> to vector<1xf32>
    %15 = vector.shape_cast %14 : vector<1xf32> to vector<1x1x1xf32>
    %16 = vector.extract %15[0, 0, 0] : f32 from vector<1x1x1xf32>
    %c0_i32 = arith.constant 0 : i32
    %17 = arith.cmpi eq, %arg1, %c0_i32 : i32
    %18 = arith.extui %17 : i1 to i32
    %c0_i32_6 = arith.constant 0 : i32
    %19 = arith.cmpi ne, %18, %c0_i32_6 : i32
    scf.if %19 {
      %c0_11 = arith.constant 0 : index
      %c0_12 = arith.constant 0 : index
      %c0_13 = arith.constant 0 : index
      %26 = vector.load %arg4[%c0_11, %c0_12, %c0_13] : memref<1x4x16xf32, #tpu.memory_space<vmem>>, vector<1x4x16xf32>
      %27 = vector.shape_cast %26 : vector<1x4x16xf32> to vector<4x16xf32>
      %c0_14 = arith.constant 0 : index
      %c0_15 = arith.constant 0 : index
      %c0_16 = arith.constant 0 : index
      %28 = vector.load %arg5[%c0_14, %c0_15, %c0_16] : memref<1x4x16xf32, #tpu.memory_space<vmem>>, vector<1x4x16xf32>
      %29 = vector.shape_cast %28 : vector<1x4x16xf32> to vector<4x16xf32>
      %30 = arith.subf %27, %29 : vector<4x16xf32>
      %31 = arith.mulf %30, %30 : vector<4x16xf32>
      %32 = vector.shape_cast %31 : vector<4x16xf32> to vector<1x4x16xf32>
      %cst_17 = arith.constant dense<0.000000e+00> : vector<1xf32>
      %33 = vector.multi_reduction <add>, %32, %cst_17 [1, 2] : vector<1x4x16xf32> to vector<1xf32>
      %34 = vector.shape_cast %33 : vector<1xf32> to vector<1x1x1xf32>
      %35 = vector.extract %34[0, 0, 0] : f32 from vector<1x1x1xf32>
      %36 = vector.extract_strided_slice %27 {offsets = [0, 0], sizes = [3, 16], strides = [1, 1]} : vector<4x16xf32> to vector<3x16xf32>
      %37 = vector.extract_strided_slice %29 {offsets = [1, 0], sizes = [3, 16], strides = [1, 1]} : vector<4x16xf32> to vector<3x16xf32>
      %38 = arith.subf %36, %37 : vector<3x16xf32>
      %39 = vector.extract_strided_slice %27 {offsets = [3, 0], sizes = [1, 16], strides = [1, 1]} : vector<4x16xf32> to vector<1x16xf32>
      %40 = vector.extract_strided_slice %29 {offsets = [0, 0], sizes = [1, 16], strides = [1, 1]} : vector<4x16xf32> to vector<1x16xf32>
      %41 = arith.subf %39, %40 : vector<1x16xf32>
      %42 = arith.mulf %38, %38 : vector<3x16xf32>
      %43 = vector.shape_cast %42 : vector<3x16xf32> to vector<1x3x16xf32>
      %cst_18 = arith.constant dense<0.000000e+00> : vector<1xf32>
      %44 = vector.multi_reduction <add>, %43, %cst_18 [1, 2] : vector<1x3x16xf32> to vector<1xf32>
      %45 = vector.shape_cast %44 : vector<1xf32> to vector<1x1x1xf32>
      %46 = vector.extract %45[0, 0, 0] : f32 from vector<1x1x1xf32>
      %47 = arith.mulf %41, %41 : vector<1x16xf32>
      %48 = vector.shape_cast %47 : vector<1x16xf32> to vector<1x1x16xf32>
      %cst_19 = arith.constant dense<0.000000e+00> : vector<1xf32>
      %49 = vector.multi_reduction <add>, %48, %cst_19 [1, 2] : vector<1x1x16xf32> to vector<1xf32>
      %50 = vector.shape_cast %49 : vector<1xf32> to vector<1x1x1xf32>
      %51 = vector.extract %50[0, 0, 0] : f32 from vector<1x1x1xf32>
      %52 = arith.addf %46, %51 : f32
      %c0_20 = arith.constant 0 : index
      %53 = memref.load %arg7[%c0_20] : memref<4xf32, #tpu.memory_space<smem>>
      memref.store %9, %arg7[%c0_20] : memref<4xf32, #tpu.memory_space<smem>>
      %c1 = arith.constant 1 : index
      %54 = memref.load %arg7[%c1] : memref<4xf32, #tpu.memory_space<smem>>
      memref.store %16, %arg7[%c1] : memref<4xf32, #tpu.memory_space<smem>>
      %c2 = arith.constant 2 : index
      %55 = memref.load %arg7[%c2] : memref<4xf32, #tpu.memory_space<smem>>
      memref.store %35, %arg7[%c2] : memref<4xf32, #tpu.memory_space<smem>>
      %c3 = arith.constant 3 : index
      %56 = memref.load %arg7[%c3] : memref<4xf32, #tpu.memory_space<smem>>
      memref.store %52, %arg7[%c3] : memref<4xf32, #tpu.memory_space<smem>>
    } else {
    }
    %c0_i32_7 = arith.constant 0 : i32
    %20 = arith.cmpi sgt, %arg1, %c0_i32_7 : i32
    %21 = arith.extui %20 : i1 to i32
    %c0_i32_8 = arith.constant 0 : i32
    %22 = arith.cmpi ne, %21, %c0_i32_8 : i32
    scf.if %22 {
      %c0_11 = arith.constant 0 : index
      %26 = memref.load %arg7[%c0_11] : memref<4xf32, #tpu.memory_space<smem>>
      %27 = arith.addf %26, %9 : f32
      %c0_12 = arith.constant 0 : index
      %28 = memref.load %arg7[%c0_12] : memref<4xf32, #tpu.memory_space<smem>>
      memref.store %27, %arg7[%c0_12] : memref<4xf32, #tpu.memory_space<smem>>
      %c1 = arith.constant 1 : index
      %29 = memref.load %arg7[%c1] : memref<4xf32, #tpu.memory_space<smem>>
      %30 = arith.addf %29, %16 : f32
      %c1_13 = arith.constant 1 : index
      %31 = memref.load %arg7[%c1_13] : memref<4xf32, #tpu.memory_space<smem>>
      memref.store %30, %arg7[%c1_13] : memref<4xf32, #tpu.memory_space<smem>>
    } else {
    }
    %c0_i32_9 = arith.constant 0 : i32
    %23 = arith.cmpi eq, %arg1, %c0_i32_9 : i32
    %24 = arith.extui %23 : i1 to i32
    %c0_i32_10 = arith.constant 0 : i32
    %25 = arith.cmpi ne, %24, %c0_i32_10 : i32
    scf.if %25 {
      %26 = tpu.iota {dimensions = array<i32: 0>} : vector<8x128xi32>
      %c0_i32_11 = arith.constant 0 : i32
      %27 = vector.broadcast %c0_i32_11 : i32 to vector<8x128xi32>
      %28 = arith.cmpi eq, %26, %27 : vector<8x128xi32>
      %c0_12 = arith.constant 0 : index
      %29 = memref.load %arg7[%c0_12] : memref<4xf32, #tpu.memory_space<smem>>
      %c1_i32 = arith.constant 1 : i32
      %30 = vector.broadcast %c1_i32 : i32 to vector<8x128xi32>
      %31 = arith.cmpi eq, %26, %30 : vector<8x128xi32>
      %c1 = arith.constant 1 : index
      %32 = memref.load %arg7[%c1] : memref<4xf32, #tpu.memory_space<smem>>
      %c2_i32 = arith.constant 2 : i32
      %33 = vector.broadcast %c2_i32 : i32 to vector<8x128xi32>
      %34 = arith.cmpi eq, %26, %33 : vector<8x128xi32>
      %c2 = arith.constant 2 : index
      %35 = memref.load %arg7[%c2] : memref<4xf32, #tpu.memory_space<smem>>
      %c3_i32 = arith.constant 3 : i32
      %36 = vector.broadcast %c3_i32 : i32 to vector<8x128xi32>
      %37 = arith.cmpi eq, %26, %36 : vector<8x128xi32>
      %c3 = arith.constant 3 : index
      %38 = memref.load %arg7[%c3] : memref<4xf32, #tpu.memory_space<smem>>
      %cst_13 = arith.constant 0.000000e+00 : f32
      %39 = vector.broadcast %38 : f32 to vector<8x128xf32>
      %40 = vector.broadcast %cst_13 : f32 to vector<8x128xf32>
      %41 = arith.select %37, %39, %40 : vector<8x128xi1>, vector<8x128xf32>
      %42 = vector.broadcast %35 : f32 to vector<8x128xf32>
      %43 = arith.select %34, %42, %41 : vector<8x128xi1>, vector<8x128xf32>
      %44 = vector.broadcast %32 : f32 to vector<8x128xf32>
      %45 = arith.select %31, %44, %43 : vector<8x128xi1>, vector<8x128xf32>
      %46 = vector.broadcast %29 : f32 to vector<8x128xf32>
      %47 = arith.select %28, %46, %45 : vector<8x128xi1>, vector<8x128xf32>
      %c0_14 = arith.constant 0 : index
      %c0_15 = arith.constant 0 : index
      %c0_16 = arith.constant 0 : index
      %48 = vector.load %arg6[%c0_14, %c0_15, %c0_16] : memref<1x8x128xf32, #tpu.memory_space<vmem>>, vector<1x8x128xf32>
      %49 = vector.shape_cast %48 : vector<1x8x128xf32> to vector<8x128xf32>
      %50 = vector.shape_cast %47 : vector<8x128xf32> to vector<1x8x128xf32>
      tpu.vector_store %arg6[%c0_14, %c0_15, %c0_16], %50 {strides = array<i32>} : memref<1x8x128xf32, #tpu.memory_space<vmem>>, vector<1x8x128xf32>,
    } else {
    }
    return
  }
  func.func @transform_0(%arg0: i32, %arg1: i32) -> (i32, i32, i32) {
    %c0_i32 = arith.constant 0 : i32
    %c0_i32_0 = arith.constant 0 : i32
    return %arg0, %c0_i32, %arg1 : i32, i32, i32
  }
  func.func @transform_1(%arg0: i32, %arg1: i32) -> (i32, i32, i32) {
    %c0_i32 = arith.constant 0 : i32
    %c0_i32_0 = arith.constant 0 : i32
    return %arg0, %c0_i32, %arg1 : i32, i32, i32
  }
  func.func @transform_2(%arg0: i32, %arg1: i32) -> (i32, i32, i32) {
    %c0_i32 = arith.constant 0 : i32
    %c0_i32_0 = arith.constant 0 : i32
    %c0_i32_1 = arith.constant 0 : i32
    return %arg0, %c0_i32, %c0_i32_0 : i32, i32, i32
  }
  func.func @transform_3(%arg0: i32, %arg1: i32) -> (i32, i32, i32) {
    %c0_i32 = arith.constant 0 : i32
    %c0_i32_0 = arith.constant 0 : i32
    %c0_i32_1 = arith.constant 0 : i32
    return %arg0, %c0_i32, %c0_i32_0 : i32, i32, i32
  }
  func.func @transform_4(%arg0: i32, %arg1: i32) -> (i32, i32, i32) {
    %c0_i32 = arith.constant 0 : i32
    %c0_i32_0 = arith.constant 0 : i32
    %c0_i32_1 = arith.constant 0 : i32
    return %arg0, %c0_i32, %c0_i32_0 : i32, i32, i32
  }
}

</mosaic_0001>

<llo_original>
// kernel: mse_loss_forward.1
$region0: #{mse_loss_forward.1}
  #allocation0 [shape = 'u32[]', space=smem, size = 0x4, offset = 0x4, fixed_abs, tag = 'smem constant byte address 0x4 - core index']
  #allocation1 [shape = 'u32[144,128]{1,0:T(1,128)}', space=vmem, size = 0x12000, scoped, tag = 'internal scratch']
  #allocation2 [shape = 'f32[4]{0:T(128)}', space=smem, size = 0x200, scoped, tag = 'scratch operand']
  %s0 = inlined_call_operand.vmem [shape: f32[2,8,128], index: 0, kind: input, shape index: {}]
  %s1 = inlined_call_operand.vmem [shape: f32[2,8,128], index: 1, kind: input, shape index: {}]
  %s2 = inlined_call_operand.vmem [shape: f32[2,4,16], index: 2, kind: input, shape index: {}]
  %s3 = inlined_call_operand.vmem [shape: f32[2,4,16], index: 3, kind: input, shape index: {}]
  %s4 = inlined_call_operand.vmem [shape: f32[2,8,128], index: 4, kind: output, shape index: {}]
  %s5 = sld [smem:[#allocation0]]
  $region61: #{mse_loss_forward.1} parent=0
    _
  %s7 = ssub.s32 1, %s5
  %s8 = scalar_select 0, %s7, %s5
  loop: start=0, step=1, limit=4
  $region2: #{mse_loss_forward.1} parent=0 // loop_pre_header
    _
  $region3: #{mse_loss_forward.1} parent=0 // loop_header
    %s10 = sphi 0, %s14
    %p11 = scmp.ge.s32.totalorder %s10, 4
    %s17 = sphi 0, %s29
    %s18 = sphi 0, %s25
    %s19 = sphi 0, %s17
    %s20 = sphi 0, %s18
    %s21 = sphi 0, %s19
    %s22 = sphi 0, %s20
    %s34 = sphi 0, %s36
    %s37 = sphi 0, %s34
    %s38 = sphi 0, %s37
    %s54 = sphi 0, %s38
    %s62 = sphi 0, %s64
    %s65 = sphi 0, %s62
    %s66 = sphi 0, %s65
    %s82 = sphi 0, %s66
    %s88 = sphi 0, %s90
    %s91 = sphi 0, %s88
    %s92 = sphi 0, %s91
    %s108 = sphi 0, %s92
    %s114 = sphi 0, %s116
    %s117 = sphi 0, %s114
    %s118 = sphi 0, %s117
    %s134 = sphi 0, %s118
    %s140 = sphi 0, %s142
    %s143 = sphi 0, %s140
    %s144 = sphi 0, %s143
    %s160 = sphi 0, %s144
  $region4: #{mse_loss_forward.1} parent=0 // loop_header_branch
    %13 = sbr.rel (%p11) target = $region8
  $region5: #{mse_loss_forward.1} parent=0 // loop_body
    %s15 = ssub.s32 %s10, 1
    %s16 = ssub.s32 %s10, 2
    %s23 = sadd.s32 1, %s18
    %p24 = scmp.ge.s32.totalorder %s23, 1
    %s25 = scalar_select %p24, 0, %s23
    %s26 = sadd.s32 1, %s17
    %s27 = scalar_select %p24, %s26, %s17
    %p28 = scmp.ge.s32.totalorder %s27, 2
    %s29 = scalar_select %p28, 0, %s27
    %s30 = ssub.s32 %s17, %s29
    %s31 = ssub.s32 %s18, %s25
    %s32 = sor.u32 %s30, %s31
    %p33 = scmp.eq.s32.totalorder %s32, 0
    %s35 = sadd.s32 %s34, 1
    %s36 = scalar_select %p33, %s34, %s35
    %p39 = pneg %p33
    %p40 = scmp.eq.s32.totalorder %s10, 1
    %p41 = por %p39, %p40
    %p42 = scmp.ne.s32.totalorder %s34, %s37
    %p43 = scmp.eq.s32.totalorder %s10, 0
    %p44 = por %p42, %p43
    %p45 = scmp.ne.s32.totalorder %s34, %s37
    %p46 = scmp.eq.s32.totalorder %s15, 1
    %p47 = por %p45, %p46
    %p48 = scmp.ne.s32.totalorder %s37, %s38
    %p49 = scmp.eq.s32.totalorder %s15, 0
    %p50 = por %p48, %p49
    %p51 = scmp.ne.s32.totalorder %s37, %s38
    %p52 = scmp.eq.s32.totalorder %s16, 1
    %p53 = por %p51, %p52
    %p55 = scmp.ne.s32.totalorder %s38, %s54
    %p56 = scmp.eq.s32.totalorder %s16, 0
    %p57 = por %p55, %p56
    %s58 = ssub.s32 %s17, %s29
    %s59 = ssub.s32 %s18, %s25
    %s60 = sor.u32 %s58, %s59
    %p61 = scmp.eq.s32.totalorder %s60, 0
    %s63 = sadd.s32 %s62, 1
    %s64 = scalar_select %p61, %s62, %s63
    %p67 = pneg %p61
    %p68 = scmp.eq.s32.totalorder %s10, 1
    %p69 = por %p67, %p68
    %p70 = scmp.ne.s32.totalorder %s62, %s65
    %p71 = scmp.eq.s32.totalorder %s10, 0
    %p72 = por %p70, %p71
    %p73 = scmp.ne.s32.totalorder %s62, %s65
    %p74 = scmp.eq.s32.totalorder %s15, 1
    %p75 = por %p73, %p74
    %p76 = scmp.ne.s32.totalorder %s65, %s66
    %p77 = scmp.eq.s32.totalorder %s15, 0
    %p78 = por %p76, %p77
    %p79 = scmp.ne.s32.totalorder %s65, %s66
    %p80 = scmp.eq.s32.totalorder %s16, 1
    %p81 = por %p79, %p80
    %p83 = scmp.ne.s32.totalorder %s66, %s82
    %p84 = scmp.eq.s32.totalorder %s16, 0
    %p85 = por %p83, %p84
    %s86 = ssub.s32 %s17, %s29
    %p87 = scmp.eq.s32.totalorder %s86, 0
    %s89 = sadd.s32 %s88, 1
    %s90 = scalar_select %p87, %s88, %s89
    %p93 = pneg %p87
    %p94 = scmp.eq.s32.totalorder %s10, 1
    %p95 = por %p93, %p94
    %p96 = scmp.ne.s32.totalorder %s88, %s91
    %p97 = scmp.eq.s32.totalorder %s10, 0
    %p98 = por %p96, %p97
    %p99 = scmp.ne.s32.totalorder %s88, %s91
    %p100 = scmp.eq.s32.totalorder %s15, 1
    %p101 = por %p99, %p100
    %p102 = scmp.ne.s32.totalorder %s91, %s92
    %p103 = scmp.eq.s32.totalorder %s15, 0
    %p104 = por %p102, %p103
    %p105 = scmp.ne.s32.totalorder %s91, %s92
    %p106 = scmp.eq.s32.totalorder %s16, 1
    %p107 = por %p105, %p106
    %p109 = scmp.ne.s32.totalorder %s92, %s108
    %p110 = scmp.eq.s32.totalorder %s16, 0
    %p111 = por %p109, %p110
    %s112 = ssub.s32 %s17, %s29
    %p113 = scmp.eq.s32.totalorder %s112, 0
    %s115 = sadd.s32 %s114, 1
    %s116 = scalar_select %p113, %s114, %s115
    %p119 = pneg %p113
    %p120 = scmp.eq.s32.totalorder %s10, 1
    %p121 = por %p119, %p120
    %p122 = scmp.ne.s32.totalorder %s114, %s117
    %p123 = scmp.eq.s32.totalorder %s10, 0
    %p124 = por %p122, %p123
    %p125 = scmp.ne.s32.totalorder %s114, %s117
    %p126 = scmp.eq.s32.totalorder %s15, 1
    %p127 = por %p125, %p126
    %p128 = scmp.ne.s32.totalorder %s117, %s118
    %p129 = scmp.eq.s32.totalorder %s15, 0
    %p130 = por %p128, %p129
    %p131 = scmp.ne.s32.totalorder %s117, %s118
    %p132 = scmp.eq.s32.totalorder %s16, 1
    %p133 = por %p131, %p132
    %p135 = scmp.ne.s32.totalorder %s118, %s134
    %p136 = scmp.eq.s32.totalorder %s16, 0
    %p137 = por %p135, %p136
    %s138 = ssub.s32 %s17, %s29
    %p139 = scmp.eq.s32.totalorder %s138, 0
    %s141 = sadd.s32 %s140, 1
    %s142 = scalar_select %p139, %s140, %s141
    %p145 = pneg %p139
    %p146 = scmp.eq.s32.totalorder %s10, 1
    %p147 = por %p145, %p146
    %p148 = scmp.ne.s32.totalorder %s140, %s143
    %p149 = scmp.eq.s32.totalorder %s10, 0
    %p150 = por %p148, %p149
    %p151 = scmp.ne.s32.totalorder %s140, %s143
    %p152 = scmp.eq.s32.totalorder %s15, 1
    %p153 = por %p151, %p152
    %p154 = scmp.ne.s32.totalorder %s143, %s144
    %p155 = scmp.eq.s32.totalorder %s15, 0
    %p156 = por %p154, %p155
    %p157 = scmp.ne.s32.totalorder %s143, %s144
    %p158 = scmp.eq.s32.totalorder %s16, 1
    %p159 = por %p157, %p158
    %p161 = scmp.ne.s32.totalorder %s144, %s160
    %p162 = scmp.eq.s32.totalorder %s16, 0
    %p163 = por %p161, %p162
    %p164 = scmp.le.s32.totalorder 1, %s10
    %p165 = scmp.lt.s32.totalorder %s10, 3
    %p166 = pnand %p164, %p165
    %p167 = pneg %p166
    // Predicated region
    $region9: #{mse_loss_forward.1} parent=5 // pred_check
      _
    $region10: #{mse_loss_forward.1} parent=5 // pred_check_branch
      %169 = sbr.rel (%p166) target = $region12
    $region11: #{mse_loss_forward.1} parent=5 // pred_region
      %s170 = ssub.s32 %s10, 1
    $region12: #{mse_loss_forward.1} parent=5 // pred_fallthru
      _
    %p171 = scmp.lt.s32.totalorder %s10, 2
    // Predicated region
    $region13: #{mse_loss_forward.1} parent=5 // pred_check
      %p172 = pneg %p171
    $region14: #{mse_loss_forward.1} parent=5 // pred_check_branch
      %174 = sbr.rel (%p172) target = $region16
    $region15: #{mse_loss_forward.1} parent=5 // pred_region
      // Predicated region
      $region17: #{mse_loss_forward.1} parent=15 // pred_check
        %p175 = pneg %p44
      $region18: #{mse_loss_forward.1} parent=15 // pred_check_branch
        %177 = sbr.rel (%p175) target = $region20
      $region19: #{mse_loss_forward.1} parent=15 // pred_region
        %p178 = scmp.lt.s32.totalorder %s17, 1
        %s179 = scalar_select %p178, %s17, 1
        %p180 = scmp.lt.s32.totalorder %s18, 0
        %s181 = scalar_select %p180, %s18, 0
        %s182 = sadd.s32 %s181, %s179
        %s183 = smul.addr %s182, 8
        %s184 = scalar_lea.vmem %s0, %s183
      $region20: #{mse_loss_forward.1} parent=15 // pred_fallthru
        _
      // Predicated region
      $region21: #{mse_loss_forward.1} parent=15 // pred_check
        %p185 = pneg %p72
      $region22: #{mse_loss_forward.1} parent=15 // pred_check_branch
        %187 = sbr.rel (%p185) target = $region24
      $region23: #{mse_loss_forward.1} parent=15 // pred_region
        %p188 = scmp.lt.s32.totalorder %s17, 1
        %s189 = scalar_select %p188, %s17, 1
        %p190 = scmp.lt.s32.totalorder %s18, 0
        %s191 = scalar_select %p190, %s18, 0
        %s192 = sadd.s32 %s191, %s189
        %s193 = smul.addr %s192, 8
        %s194 = scalar_lea.vmem %s1, %s193
      $region24: #{mse_loss_forward.1} parent=15 // pred_fallthru
        _
      // Predicated region
      $region25: #{mse_loss_forward.1} parent=15 // pred_check
        %p195 = pneg %p98
      $region26: #{mse_loss_forward.1} parent=15 // pred_check_branch
        %197 = sbr.rel (%p195) target = $region28
      $region27: #{mse_loss_forward.1} parent=15 // pred_region
        %p198 = scmp.lt.s32.totalorder %s17, 1
        %s199 = scalar_select %p198, %s17, 1
        %s200 = smul.addr %s199, 4
        %s201 = scalar_lea.vmem %s2, %s200
      $region28: #{mse_loss_forward.1} parent=15 // pred_fallthru
        _
      // Predicated region
      $region29: #{mse_loss_forward.1} parent=15 // pred_check
        %p202 = pneg %p124
      $region30: #{mse_loss_forward.1} parent=15 // pred_check_branch
        %204 = sbr.rel (%p202) target = $region32
      $region31: #{mse_loss_forward.1} parent=15 // pred_region
        %p205 = scmp.lt.s32.totalorder %s17, 1
        %s206 = scalar_select %p205, %s17, 1
        %s207 = smul.addr %s206, 4
        %s208 = scalar_lea.vmem %s3, %s207
      $region32: #{mse_loss_forward.1} parent=15 // pred_fallthru
        _
    $region16: #{mse_loss_forward.1} parent=5 // pred_fallthru
      _
    %p209 = scmp.le.s32.totalorder 1, %s10
    %p210 = scmp.lt.s32.totalorder %s10, 3
    %p211 = pnand %p209, %p210
    %p212 = pneg %p211
    // Predicated region
    $region33: #{mse_loss_forward.1} parent=5 // pred_check
      _
    $region34: #{mse_loss_forward.1} parent=5 // pred_check_branch
      %214 = sbr.rel (%p211) target = $region36
    $region35: #{mse_loss_forward.1} parent=5 // pred_region
      %s215 = ssub.s32 %s10, 1
      %p216 = scmp.lt.s32.totalorder %s19, 1
      %s217 = scalar_select %p216, %s19, 1
      %p218 = scmp.lt.s32.totalorder %s20, 0
      %s219 = scalar_select %p218, %s20, 0
      %s220 = sadd.s32 %s219, %s217
      %s221 = smul.addr %s220, 8
      %s222 = scalar_lea.vmem %s0, %s221
      %p223 = pneg %p50
      %p224 = pneg %p47
      %p225 = scmp.lt.s32.totalorder %s19, 1
      %s226 = scalar_select %p225, %s19, 1
      %p227 = scmp.lt.s32.totalorder %s20, 0
      %s228 = scalar_select %p227, %s20, 0
      %s229 = sadd.s32 %s228, %s226
      %s230 = smul.addr %s229, 8
      %s231 = scalar_lea.vmem %s1, %s230
      %p232 = pneg %p78
      %p233 = pneg %p75
      %p234 = scmp.lt.s32.totalorder %s19, 1
      %s235 = scalar_select %p234, %s19, 1
      %s236 = smul.addr %s235, 4
      %s237 = scalar_lea.vmem %s2, %s236
      %p238 = pneg %p104
      %p239 = pneg %p101
      %p240 = scmp.lt.s32.totalorder %s19, 1
      %s241 = scalar_select %p240, %s19, 1
      %s242 = smul.addr %s241, 4
      %s243 = scalar_lea.vmem %s3, %s242
      %p244 = pneg %p130
      %p245 = pneg %p127
      %p246 = pneg %p156
      %p247 = pneg %p153
      %p248 = scmp.lt.s32.totalorder %s19, 1
      %s249 = scalar_select %p248, %s19, 1
      %s250 = smul.addr %s249, 8
      %s251 = scalar_lea.vmem %s4, %s250
      %p252 = scmp.lt.s32.totalorder %s19, 1
      %s253 = scalar_select %p252, %s19, 1
      %p254 = scmp.lt.s32.totalorder %s20, 0
      %s255 = scalar_select %p254, %s20, 0
      %s256 = sadd.s32 %s255, %s253
      %s257 = smul.addr %s256, 8
      %s258 = scalar_lea.vmem %s0, %s257
      %p259 = scmp.lt.s32.totalorder %s19, 1
      %s260 = scalar_select %p259, %s19, 1
      %p261 = scmp.lt.s32.totalorder %s20, 0
      %s262 = scalar_select %p261, %s20, 0
      %s263 = sadd.s32 %s262, %s260
      %s264 = smul.addr %s263, 8
      %s265 = scalar_lea.vmem %s1, %s264
      %p266 = scmp.lt.s32.totalorder %s19, 1
      %s267 = scalar_select %p266, %s19, 1
      %s268 = smul.addr %s267, 4
      %s269 = scalar_lea.vmem %s2, %s268
      %p270 = scmp.lt.s32.totalorder %s19, 1
      %s271 = scalar_select %p270, %s19, 1
      %s272 = smul.addr %s271, 4
      %s273 = scalar_lea.vmem %s3, %s272
      %p274 = scmp.lt.s32.totalorder %s19, 1
      %s275 = scalar_select %p274, %s19, 1
      %s276 = smul.addr %s275, 8
      %s277 = scalar_lea.vmem %s4, %s276
      %v278 = vld [vmem:[%s258] sm:$0xff]
      %v279 = vld [vmem:[%s265] sm:$0xff]
      %v280 = vsub.f32 %v278, %v279
      %v281 = vmul.f32 %v280, %v280
      %282 = vadd.xlane.f32.xlu0 %v281
      %v283 = vpop.xlane.xlu0 %282
      %v284 = vrot.slane %v283, 4
      %v285 = vadd.f32 %v283, %v284
      %v286 = vrot.slane %v285, 2
      %v287 = vadd.f32 %v285, %v286
      %v288 = vrot.slane %v287, 1
      %v289 = vadd.f32 %v287, %v288
      %s290 = vtos %v289
      %v291 = vrot.slane %v279, 2
      %v292 = vsub.f32 %v278, %v291
      %v293 = vmul.f32 %v292, %v292
      %294 = vadd.xlane.f32.xlu0 %v293
      %v295 = vpop.xlane.xlu0 %294
      %v296 = vrot.slane %v295, 4
      %v297 = vadd.f32 %v295, %v296
      %v298 = vrot.slane %v297, 2
      %v299 = vadd.f32 %v297, %v298
      %v300 = vrot.slane %v299, 1
      %v301 = vadd.f32 %v299, %v300
      %s302 = vtos %v301
      %p303 = scmp.eq.s32.totalorder %s20, 0
      // Predicated region
      $region37: #{mse_loss_forward.1} parent=35 // pred_check
        %p304 = pneg %p303
      $region38: #{mse_loss_forward.1} parent=35 // pred_check_branch
        %306 = sbr.rel (%p304) target = $region40
      $region39: #{mse_loss_forward.1} parent=35 // pred_region
        %v307 = vld [vmem:[%s269] sm:$0xf]
        %v308 = vld [vmem:[%s273] sm:$0xf]
        %v309 = vsub.f32 %v307, %v308
        %v310 = vmul.f32 %v309, %v309
        %vm311 = vcmask 125952
        %v312 = vsel %vm311, %v310, 0.0
        %313 = vadd.xlane.f32.xlu0 %v312
        %v314 = vpop.xlane.xlu0 %313
        %v315 = vrot.slane %v314, 4
        %v316 = vadd.f32 %v314, %v315
        %v317 = vrot.slane %v316, 2
        %v318 = vadd.f32 %v316, %v317
        %v319 = vrot.slane %v318, 1
        %v320 = vadd.f32 %v318, %v319
        %s321 = vtos %v320
        %v323 = vrot.slane %v308, 1
        %v325 = vsub.f32 %v307, %v323
        %v326 = vrot.slane %v308, 5
        %v328 = vsub.f32 %v307, %v326
        %v329 = vmul.f32 %v325, %v325
        %vm330 = vcmask 124928
        %v331 = vsel %vm330, %v329, 0.0
        %332 = vadd.xlane.f32.xlu0 %v331
        %v333 = vpop.xlane.xlu0 %332
        %v334 = vrot.slane %v333, 4
        %v335 = vadd.f32 %v333, %v334
        %v336 = vrot.slane %v335, 2
        %v337 = vadd.f32 %v335, %v336
        %v338 = vrot.slane %v337, 1
        %v339 = vadd.f32 %v337, %v338
        %s340 = vtos %v339
        %v341 = vmul.f32 %v328, %v328
        %v343 = vrot.slane %v341, 3
        %vm345 = vcmask 122880
        %v346 = vsel %vm345, %v343, 0.0
        %347 = vadd.xlane.f32.xlu0 %v346
        %v348 = vpop.xlane.xlu0 %347
        %v349 = vrot.slane %v348, 4
        %v350 = vadd.f32 %v348, %v349
        %v351 = vrot.slane %v350, 2
        %v352 = vadd.f32 %v350, %v351
        %v353 = vrot.slane %v352, 1
        %v354 = vadd.f32 %v352, %v353
        %s355 = vtos %v354
        %s356 = sadd.f32 %s340, %s355
        %s357 = scalar_lea.smem [#allocation2], 0
        %358 = sst [smem:[%s357]] %s290
        %s359 = scalar_lea.smem [#allocation2], 1
        %360 = sst [smem:[%s359]] %s302
        %s361 = scalar_lea.smem [#allocation2], 2
        %362 = sst [smem:[%s361]] %s321
        %s363 = scalar_lea.smem [#allocation2], 3
        %364 = sst [smem:[%s363]] %s356
      $region40: #{mse_loss_forward.1} parent=35 // pred_fallthru
        _
      %p365 = scmp.gt.s32.totalorder %s20, 0
      // Predicated region
      $region41: #{mse_loss_forward.1} parent=35 // pred_check
        %p366 = pneg %p365
      $region42: #{mse_loss_forward.1} parent=35 // pred_check_branch
        %368 = sbr.rel (%p366) target = $region44
      $region43: #{mse_loss_forward.1} parent=35 // pred_region
        %s369 = sld [smem:[#allocation2]]
        %s370 = sadd.f32 %s369, %s290
        %s371 = scalar_lea.smem [#allocation2], 0
        %372 = sst [smem:[%s371]] %s370
        %s373 = sld [smem:[#allocation2 + $0x1]]
        %s374 = sadd.f32 %s373, %s302
        %s375 = scalar_lea.smem [#allocation2], 1
        %376 = sst [smem:[%s375]] %s374
      $region44: #{mse_loss_forward.1} parent=35 // pred_fallthru
        _
      // Predicated region
      $region45: #{mse_loss_forward.1} parent=35 // pred_check
        %p377 = pneg %p303
      $region46: #{mse_loss_forward.1} parent=35 // pred_check_branch
        %379 = sbr.rel (%p377) target = $region48
      $region47: #{mse_loss_forward.1} parent=35 // pred_region
        %v380 = vlaneseq
        %v381 = vshrl.u32 %v380, 7
        %vm382 = vcmp.eq.s32.totalorder %v381, 0
        %s383 = sld [smem:[#allocation2]]
        %vm384 = vcmp.eq.s32.totalorder %v381, 1
        %s385 = sld [smem:[#allocation2 + $0x1]]
        %vm386 = vcmp.eq.s32.totalorder %v381, 2
        %s387 = sld [smem:[#allocation2 + $0x2]]
        %vm388 = vcmp.eq.s32.totalorder %v381, 3
        %s389 = sld [smem:[#allocation2 + $0x3]]
        %v390 = vstv %s389
        %v391 = vsel %vm388, %v390, 0.0
        %v392 = vstv %s387
        %v393 = vsel %vm386, %v392, %v391
        %v394 = vstv %s385
        %v395 = vsel %vm384, %v394, %v393
        %v396 = vstv %s383
        %v397 = vsel %vm382, %v396, %v395
        %398 = vst [vmem:[%s277] sm:$0xff] %v397
      $region48: #{mse_loss_forward.1} parent=35 // pred_fallthru
        _
      %p399 = scmp.lt.s32.totalorder %s19, 1
      %s400 = scalar_select %p399, %s19, 1
      %s401 = smul.addr %s400, 8
      %s402 = scalar_lea.vmem %s4, %s401
      // Predicated region
      $region49: #{mse_loss_forward.1} parent=35 // pred_check
        %p403 = pneg %p153
      $region50: #{mse_loss_forward.1} parent=35 // pred_check_branch
        %405 = sbr.rel (%p403) target = $region52
      $region51: #{mse_loss_forward.1} parent=35 // pred_region
        _
      $region52: #{mse_loss_forward.1} parent=35 // pred_fallthru
        _
    $region36: #{mse_loss_forward.1} parent=5 // pred_fallthru
      _
    %p406 = scmp.le.s32.totalorder 2, %s10
    // Predicated region
    $region53: #{mse_loss_forward.1} parent=5 // pred_check
      %p407 = pneg %p406
    $region54: #{mse_loss_forward.1} parent=5 // pred_check_branch
      %409 = sbr.rel (%p407) target = $region56
    $region55: #{mse_loss_forward.1} parent=5 // pred_region
      %s410 = ssub.s32 %s10, 2
      // Predicated region
      $region57: #{mse_loss_forward.1} parent=55 // pred_check
        %p411 = pneg %p159
      $region58: #{mse_loss_forward.1} parent=55 // pred_check_branch
        %413 = sbr.rel (%p411) target = $region60
      $region59: #{mse_loss_forward.1} parent=55 // pred_region
        %p414 = scmp.lt.s32.totalorder %s21, 1
        %s415 = scalar_select %p414, %s21, 1
        %s416 = smul.addr %s415, 8
        %s417 = scalar_lea.vmem %s4, %s416
      $region60: #{mse_loss_forward.1} parent=55 // pred_fallthru
        _
    $region56: #{mse_loss_forward.1} parent=5 // pred_fallthru
      _
  $region6: #{mse_loss_forward.1} parent=0 // loop_footer
    %s14 = sadd.s32 1, %s10
  $region7: #{mse_loss_forward.1} parent=0 // loop_footer_branch
    %9 = sbr.rel target = $region3
  $region8: #{mse_loss_forward.1} parent=0 // loop_exit
    _

</llo_original>
